<compile_context>
chip_gen: v7x
topology: tpu7x:2x2x1
jax: 0.10.0
libtpu: 0.0.40
codegen_flags: <defaults>
</compile_context>

<pallas_src>
import functools

import jax
import jax.numpy as jnp
from jax.experimental import pallas as pl
from jax.experimental.pallas import tpu as pltpu

LANES = 128
MAX_BLOCK_ROWS = 4096   # (4096, 128) f32 = 2 MiB per input per pipeline buffer


def _num_tensorcores():
    """Best-effort TensorCores per device (2 on megacore/v7x, else 1)."""
    try:
        info = pltpu.get_tpu_info()
        for name in ("num_cores", "core_count", "num_tensorcores", "tensorcore_count"):
            n = getattr(info, name, None)
            if isinstance(n, int) and n >= 1:
                return n
    except Exception:
        pass
    try:
        n = getattr(jax.devices()[0], "num_cores", None)
        if isinstance(n, int) and n >= 1:
            return n
    except Exception:
        pass
    return 1


def _static_int_pow(p, n):
    """p**n for a static Python int n >= 0, unrolled (exponentiation by squaring)."""
    if n == 0:
        return jnp.ones_like(p)
    result = None
    base = p
    while n:
        if n & 1:
            result = base if result is None else result * base
        n >>= 1
        if n:
            base = base * base
    return result


def _focal_loss_kernel(x_ref, t_ref, o_ref, *, gamma, int_gamma, binary_targets,
                       rows, block_rows, blocks_per_split,
                       needs_block_guard, needs_row_mask):
    i = pl.program_id(0)   # split index ("parallel": TensorCore shard)
    j = pl.program_id(1)   # block within this split ("arbitrary": reduction)

    @pl.when(j == 0)
    def _init():
        o_ref[...] = jnp.zeros_like(o_ref)

    # Logical block id and how many of its rows lie inside the array.  Row
    # counts are small ints, so no int32 overflow even for multi-GB inputs.
    blk = i * blocks_per_split + j
    valid_rows = rows - blk * block_rows

    def _body():
        x = x_ref[...].astype(jnp.float32)
        t = t_ref[...].astype(jnp.float32)

        # Shared transcendentals (EUP): e = exp(-|x|), lp = log1p(e).
        ax = jnp.abs(x)
        e = jnp.exp(-ax)
        lp = jnp.log1p(e)

        # BCE with logits:  x - x*t + softplus(-x),  softplus(-x) = relu(-x) + lp
        bce = x - x * t + jnp.maximum(-x, 0.0) + lp

        # Focal modulation  exp(gamma * logsigmoid(z)),  z = -x*(2t-1) = x*(1-2t)
        z = x * (1.0 - 2.0 * t)
        if binary_targets:
            # t in {0,1}  =>  |z| == |x|, so e / lp are reused (no extra EUP).
            if int_gamma is not None:
                # sigmoid(z) = where(z>=0, 1, e) / (1+e);  focal = sigmoid(z)**gamma
                p = jnp.where(z >= 0.0, 1.0, e) / (1.0 + e)
                focal = _static_int_pow(p, int_gamma)
            else:
                log_sig = jnp.minimum(z, 0.0) - lp
                focal = jnp.exp(log_sig * gamma)
        else:
            # Exact general path (soft targets): |z| != |x| in general.
            log_sig = jnp.minimum(z, 0.0) - jnp.log1p(jnp.exp(-jnp.abs(z)))
            focal = jnp.exp(log_sig * gamma)

        loss = focal * bce

        if needs_row_mask:
            # Only the last (overhanging) block has fewer than block_rows valid
            # rows; cheap VPU compare/select folded into the single fused loop.
            row = jax.lax.broadcasted_iota(jnp.int32, loss.shape, 0)
            loss = jnp.where(row < valid_rows, loss, 0.0)

        if block_rows % 8 == 0:
            # Group-of-8-row sums into the resident (8, 128) accumulator:
            # pure VPU adds, full-tile (lane-dense, unmasked) store.
            o_ref[...] += jnp.sum(loss.reshape(-1, 8, LANES), axis=0)
        else:
            # Tiny input (< 8 rows total): reduce to one row, still full-tile store.
            s = jnp.sum(loss, axis=0, keepdims=True)
            row0 = jax.lax.broadcasted_iota(jnp.int32, (8, LANES), 0) == 0
            o_ref[...] += jnp.where(row0, s, 0.0)

    if needs_block_guard:
        # Clamped duplicate blocks (uneven split across TensorCores) skip all
        # compute; their DMA is still issued by the BlockSpec but contributes 0.
        pl.when(valid_rows > 0)(_body)
    else:
        _body()


def _focal_elementwise(x, t, gamma):
    """Tiny jnp epilogue for the (<128-element) non-lane-aligned tail."""
    x = x.astype(jnp.float32)
    t = t.astype(jnp.float32)
    bce = x - x * t + jnp.maximum(-x, 0.0) + jnp.log1p(jnp.exp(-jnp.abs(x)))
    log_sig = jax.nn.log_sigmoid(x * (1.0 - 2.0 * t))
    return jnp.exp(log_sig * gamma) * bce


def _focal_loss(x, target, gamma, binary_targets):
    if x.shape != target.shape:
        raise ValueError(
            "Target size ({}) must be the same as input size ({})".format(
                target.shape, x.shape))
    total = int(x.size)
    if total == 0:
        return jnp.float32(float("nan"))
    g = float(gamma)
    int_gamma = int(g) if (g >= 0.0 and g == int(g) and g <= 64.0) else None

    xf = jnp.ravel(x)
    tf = jnp.ravel(target)
    rows = total // LANES
    tail = total - rows * LANES

    tail_sum = jnp.float32(0.0)
    if tail:
        # < 128 elements; negligible.  (No full-array jnp.pad copies anymore.)
        tail_sum = jnp.sum(_focal_elementwise(xf[rows * LANES:], tf[rows * LANES:], g))
    if rows == 0:
        return tail_sum / jnp.float32(total)

    # 128-aligned prefix viewed as a lane-dense (rows, 128) slab.  For aligned
    # sizes the slice is the whole array (XLA elides it -> metadata-only).  For
    # unaligned sizes XLA may still materialize the prefix slice; a manual-DMA
    # (pl.ANY) path would avoid even that, but isn't worth the complexity here.
    x2 = xf[:rows * LANES].reshape(rows, LANES)
    t2 = tf[:rows * LANES].reshape(rows, LANES)

    if rows >= 8:
        block_rows = min(MAX_BLOCK_ROWS, (rows // 8) * 8)   # multiple of 8, <= rows
    else:
        block_rows = rows                                   # full-dim block
    nblocks = pl.cdiv(rows, block_rows)
    splits = max(1, min(_num_tensorcores(), nblocks))       # >1 only on megacore/v7x
    blocks_per_split = pl.cdiv(nblocks, splits)
    last_block = nblocks - 1
    needs_block_guard = splits * blocks_per_split != nblocks
    needs_row_mask = (rows % block_rows) != 0

    if needs_block_guard:
        def in_map(i, j):
            # Clamp so the DMA window always lies inside the array; clamped
            # (logically out-of-range) blocks are skipped in-kernel.
            return (jnp.minimum(i * blocks_per_split + j, last_block), 0)
    else:
        def in_map(i, j):
            return (i * blocks_per_split + j, 0)

    kernel = functools.partial(
        _focal_loss_kernel, gamma=g, int_gamma=int_gamma,
        binary_targets=bool(binary_targets), rows=rows, block_rows=block_rows,
        blocks_per_split=blocks_per_split, needs_block_guard=needs_block_guard,
        needs_row_mask=needs_row_mask)

    n_eup = 5 if not binary_targets else (3 if int_gamma is None else 2)
    cost = pl.CostEstimate(
        flops=int(15 * rows * LANES),
        transcendentals=int(n_eup * rows * LANES),
        bytes_accessed=int(rows * LANES * (x2.dtype.itemsize + t2.dtype.itemsize)
                           + splits * 8 * LANES * 4))

    partials = pl.pallas_call(
        kernel,
        out_shape=jax.ShapeDtypeStruct((splits * 8, LANES), jnp.float32),
        grid_spec=pltpu.PrefetchScalarGridSpec(
            num_scalar_prefetch=0,
            grid=(splits, blocks_per_split),
            in_specs=[
                pl.BlockSpec((block_rows, LANES), in_map),
                pl.BlockSpec((block_rows, LANES), in_map),
            ],
            out_specs=pl.BlockSpec((8, LANES), lambda i, j: (i, 0)),
        ),
        compiler_params=pltpu.CompilerParams(
            dimension_semantics=("parallel", "arbitrary"),
            vmem_limit_bytes=32 * 1024 * 1024,
        ),
        cost_estimate=cost,
    )(x2, t2)

    return (jnp.sum(partials) + tail_sum) / jnp.float32(total)


# gamma / binary_targets are static; ravel/reshape stay metadata-only under jit.
focal_loss = jax.jit(_focal_loss, static_argnums=(2, 3))


def focal_loss_ref(x, target, gamma):
    x = x.astype(jnp.float32)
    t = target.astype(jnp.float32)
    max_val = jnp.maximum(-x, 0.0)
    loss = x - x * t + max_val + jnp.log(jnp.exp(-max_val) + jnp.exp(-x - max_val))
    invprobs = jax.nn.log_sigmoid(-x * (t * 2.0 - 1.0))
    loss = jnp.exp(invprobs * gamma) * loss
    return jnp.mean(loss)


if __name__ == "__main__":
    key = jax.random.PRNGKey(0)
    kx, kt, kx2, kt2 = jax.random.split(key, 4)

    # A) NCHW logits with binary f32 targets, integer gamma (sigmoid-power fast path).
    x = jax.random.normal(kx, (2, 4, 16, 16), dtype=jnp.float32)
    t = (jax.random.uniform(kt, (2, 4, 16, 16)) > 0.5).astype(jnp.float32)
    out_a = jax.block_until_ready(focal_loss(x, t, 2.0, True))
    ref_a = focal_loss_ref(x, t, 2.0)
    assert jnp.allclose(out_a, ref_a, rtol=2e-5, atol=1e-6), ("A", out_a, ref_a)

    # B) Same inputs, exact general (soft-target-safe) path.
    out_b = jax.block_until_ready(focal_loss(x, t, 2.0, False))
    assert jnp.allclose(out_b, ref_a, rtol=2e-5, atol=1e-6), ("B", out_b, ref_a)

    # C) Non-128-multiple size + bf16 targets: tail handled by the jnp epilogue,
    #    no padded copies; target stays narrow in HBM.
    xc = jax.random.normal(kx2, (3, 700), dtype=jnp.float32)
    tc = (jax.random.uniform(kt2, (3, 700)) > 0.5).astype(jnp.bfloat16)
    out_c = jax.block_until_ready(focal_loss(xc, tc, 2.0, True))
    ref_c = focal_loss_ref(xc, tc, 2.0)
    assert jnp.allclose(out_c, ref_c, rtol=2e-5, atol=1e-6), ("C", out_c, ref_c)

    # D) Non-integer gamma (binary path: shared exp/log1p + one extra exp).
    out_d = jax.block_until_ready(focal_loss(x, t, 2.5, True))
    ref_d = focal_loss_ref(x, t, 2.5)
    assert jnp.allclose(out_d, ref_d, rtol=2e-5, atol=1e-6), ("D", out_d, ref_d)

    print("KERNEL_OK")
</pallas_src>

<mosaic_0001>
module attributes {stable_mosaic.version = 11 : i64} {
  func.func @_focal_loss_kernel(%arg0: i32, %arg1: i32, %arg2: memref<16x128xf32, #tpu.memory_space<vmem>>, %arg3: memref<16x128xf32, #tpu.memory_space<vmem>>, %arg4: memref<8x128xf32, #tpu.memory_space<vmem>>) attributes {dimension_semantics = [#tpu.dimension_semantics<parallel>, #tpu.dimension_semantics<arbitrary>], iteration_bounds = array<i64: 1, 1>, scalar_prefetch = 0 : i64, scratch_operands = 0 : i64, tpu.core_type = #tpu.core_type<tc>, window_params = [{transform_indices = @transform_0, window_bounds = array<i64: 16, 128>}, {transform_indices = @transform_1, window_bounds = array<i64: 16, 128>}, {transform_indices = @transform_2, window_bounds = array<i64: 8, 128>}]} {
    %c0_i32 = arith.constant 0 : i32
    %0 = arith.cmpi eq, %arg1, %c0_i32 : i32
    %1 = arith.extui %0 : i1 to i32
    %c0_i32_0 = arith.constant 0 : i32
    %2 = arith.cmpi ne, %1, %c0_i32_0 : i32
    scf.if %2 {
      %cst_16 = arith.constant 0.000000e+00 : f32
      %37 = vector.broadcast %cst_16 : f32 to vector<8x128xf32>
      %c0_17 = arith.constant 0 : index
      %c0_18 = arith.constant 0 : index
      %38 = vector.load %arg4[%c0_17, %c0_18] : memref<8x128xf32, #tpu.memory_space<vmem>>, vector<8x128xf32>
      tpu.vector_store %arg4[%c0_17, %c0_18], %37 {strides = array<i32>} : memref<8x128xf32, #tpu.memory_space<vmem>>, vector<8x128xf32>,
    } else {
    }
    %c0 = arith.constant 0 : index
    %c0_1 = arith.constant 0 : index
    %3 = vector.load %arg2[%c0, %c0_1] : memref<16x128xf32, #tpu.memory_space<vmem>>, vector<16x128xf32>
    %c0_2 = arith.constant 0 : index
    %c0_3 = arith.constant 0 : index
    %4 = vector.load %arg3[%c0_2, %c0_3] : memref<16x128xf32, #tpu.memory_space<vmem>>, vector<16x128xf32>
    %5 = math.absf %3 : vector<16x128xf32>
    %cst = arith.constant 0.000000e+00 : f32
    %6 = vector.broadcast %cst : f32 to vector<16x128xf32>
    %7 = arith.subf %6, %5 : vector<16x128xf32>
    %8 = math.exp %7 : vector<16x128xf32>
    %9 = math.log1p %8 : vector<16x128xf32>
    %10 = arith.mulf %3, %4 : vector<16x128xf32>
    %11 = arith.subf %3, %10 : vector<16x128xf32>
    %cst_4 = arith.constant 0.000000e+00 : f32
    %12 = vector.broadcast %cst_4 : f32 to vector<16x128xf32>
    %13 = arith.subf %12, %3 : vector<16x128xf32>
    %cst_5 = arith.constant 0.000000e+00 : f32
    %14 = vector.broadcast %cst_5 : f32 to vector<16x128xf32>
    %15 = arith.maximumf %13, %14 : vector<16x128xf32>
    %16 = arith.addf %11, %15 : vector<16x128xf32>
    %17 = arith.addf %16, %9 : vector<16x128xf32>
    %cst_6 = arith.constant 2.000000e+00 : f32
    %18 = vector.broadcast %cst_6 : f32 to vector<16x128xf32>
    %19 = arith.mulf %18, %4 : vector<16x128xf32>
    %cst_7 = arith.constant 1.000000e+00 : f32
    %20 = vector.broadcast %cst_7 : f32 to vector<16x128xf32>
    %21 = arith.subf %20, %19 : vector<16x128xf32>
    %22 = arith.mulf %3, %21 : vector<16x128xf32>
    %cst_8 = arith.constant 0.000000e+00 : f32
    %23 = vector.broadcast %cst_8 : f32 to vector<16x128xf32>
    %24 = arith.cmpf oge, %22, %23 : vector<16x128xf32>
    %cst_9 = arith.constant 1.000000e+00 : f32
    %25 = vector.broadcast %cst_9 : f32 to vector<16x128xf32>
    %26 = arith.select %24, %25, %8 : vector<16x128xi1>, vector<16x128xf32>
    %cst_10 = arith.constant 1.000000e+00 : f32
    %27 = vector.broadcast %cst_10 : f32 to vector<16x128xf32>
    %28 = arith.addf %27, %8 : vector<16x128xf32>
    %29 = arith.divf %26, %28 : vector<16x128xf32>
    %30 = arith.mulf %29, %29 : vector<16x128xf32>
    %31 = arith.mulf %30, %17 : vector<16x128xf32>
    %c0_11 = arith.constant 0 : index
    %c0_12 = arith.constant 0 : index
    %32 = vector.load %arg4[%c0_11, %c0_12] : memref<8x128xf32, #tpu.memory_space<vmem>>, vector<8x128xf32>
    %33 = vector.shape_cast %31 : vector<16x128xf32> to vector<2x8x128xf32>
    %cst_13 = arith.constant dense<0.000000e+00> : vector<8x128xf32>
    %34 = vector.multi_reduction <add>, %33, %cst_13 [0] : vector<2x8x128xf32> to vector<8x128xf32>
    %35 = arith.addf %32, %34 : vector<8x128xf32>
    %c0_14 = arith.constant 0 : index
    %c0_15 = arith.constant 0 : index
    %36 = vector.load %arg4[%c0_14, %c0_15] : memref<8x128xf32, #tpu.memory_space<vmem>>, vector<8x128xf32>
    tpu.vector_store %arg4[%c0_14, %c0_15], %35 {strides = array<i32>} : memref<8x128xf32, #tpu.memory_space<vmem>>, vector<8x128xf32>,
    return
  }
  func.func @transform_0(%arg0: i32, %arg1: i32) -> (i32, i32) {
    %c1_i32 = arith.constant 1 : i32
    %0 = arith.muli %arg0, %c1_i32 : i32
    %1 = arith.addi %0, %arg1 : i32
    %c0_i32 = arith.constant 0 : i32
    %c0_i32_0 = arith.constant 0 : i32
    return %1, %c0_i32 : i32, i32
  }
  func.func @transform_1(%arg0: i32, %arg1: i32) -> (i32, i32) {
    %c1_i32 = arith.constant 1 : i32
    %0 = arith.muli %arg0, %c1_i32 : i32
    %1 = arith.addi %0, %arg1 : i32
    %c0_i32 = arith.constant 0 : i32
    %c0_i32_0 = arith.constant 0 : i32
    return %1, %c0_i32 : i32, i32
  }
  func.func @transform_2(%arg0: i32, %arg1: i32) -> (i32, i32) {
    %c0_i32 = arith.constant 0 : i32
    %c0_i32_0 = arith.constant 0 : i32
    return %arg0, %c0_i32 : i32, i32
  }
}

</mosaic_0001>

<llo_original>
// kernel: _focal_loss.1
$region0: #{_focal_loss.1}
  #allocation0 [shape = 'u32[]', space=smem, size = 0x4, offset = 0x4, fixed_abs, tag = 'smem constant byte address 0x4 - core index']
  #allocation1 [shape = 'u32[144,128]{1,0:T(1,128)}', space=vmem, size = 0x12000, scoped, tag = 'internal scratch']
  %s0 = inlined_call_operand.vmem [shape: f32[16,128], index: 0, kind: input, shape index: {}]
  %s1 = inlined_call_operand.vmem [shape: f32[16,128], index: 1, kind: input, shape index: {}]
  %s2 = inlined_call_operand.vmem [shape: f32[8,128], index: 2, kind: output, shape index: {}]
  %s3 = sld [smem:[#allocation0]]
  $region22: #{_focal_loss.1} parent=0
    _
  %s5 = ssub.s32 1, %s3
  %s6 = scalar_select 0, %s5, %s3
  // Predicated region
  $region2: #{_focal_loss.1} parent=0 // pred_check
    _
  $region3: #{_focal_loss.1} parent=0 // pred_check_branch
    %8 = sbr.rel (0) target = $region5
  $region4: #{_focal_loss.1} parent=0 // pred_region
    %s9 = sadd.s32 0, 0
    %s10 = smul.u32 2, %s9
    %p11 = scmp.lt.s32.totalorder %s10, 1
    %s12 = scalar_select %p11, %s10, 1
    %s13 = smul.addr %s12, 8
    %s14 = scalar_lea.vmem %s0, %s13
    %s15 = sadd.s32 0, 0
    %s16 = smul.u32 2, %s15
  $region5: #{_focal_loss.1} parent=0 // pred_fallthru
    _
  // Predicated region
  $region6: #{_focal_loss.1} parent=0 // pred_check
    _
  $region7: #{_focal_loss.1} parent=0 // pred_check_branch
    %18 = sbr.rel (0) target = $region9
  $region8: #{_focal_loss.1} parent=0 // pred_region
    %s19 = sadd.s32 0, 0
    %s20 = smul.u32 2, %s19
    %p21 = scmp.lt.s32.totalorder %s20, 1
    %s22 = scalar_select %p21, %s20, 1
    %s23 = smul.addr %s22, 8
    %s24 = scalar_lea.vmem %s1, %s23
    %s25 = sadd.s32 0, 0
    %s26 = smul.u32 2, %s25
  $region9: #{_focal_loss.1} parent=0 // pred_fallthru
    _
  %s27 = sadd.s32 0, 0
  %s28 = smul.u32 2, %s27
  %p29 = scmp.lt.s32.totalorder %s28, 1
  %s30 = scalar_select %p29, %s28, 1
  %s31 = smul.addr %s30, 8
  %s32 = scalar_lea.vmem %s0, %s31
  %s33 = sadd.s32 0, 0
  %s34 = smul.u32 2, %s33
  %p35 = scmp.lt.s32.totalorder %s34, 1
  %s36 = scalar_select %p35, %s34, 1
  %s37 = smul.addr %s36, 8
  %s38 = scalar_lea.vmem %s1, %s37
  %s39 = sadd.s32 0, 0
  %s40 = smul.u32 2, %s39
  %p41 = scmp.lt.s32.totalorder %s40, 1
  %s42 = scalar_select %p41, %s40, 1
  %s43 = smul.addr %s42, 8
  %s44 = scalar_lea.vmem %s0, %s43
  %s45 = sadd.s32 0, 0
  %s46 = smul.u32 2, %s45
  %s47 = sadd.s32 0, 0
  %s48 = smul.u32 2, %s47
  %p49 = scmp.lt.s32.totalorder %s48, 1
  %s50 = scalar_select %p49, %s48, 1
  %s51 = smul.addr %s50, 8
  %s52 = scalar_lea.vmem %s1, %s51
  %s53 = sadd.s32 0, 0
  %s54 = smul.u32 2, %s53
  %p55 = scmp.eq.s32.totalorder 0, 0
  // Predicated region
  $region10: #{_focal_loss.1} parent=0 // pred_check
    %p56 = pneg %p55
  $region11: #{_focal_loss.1} parent=0 // pred_check_branch
    %58 = sbr.rel (%p56) target = $region13
  $region12: #{_focal_loss.1} parent=0 // pred_region
    %59 = vst [vmem:[%s2] sm:$0xff] 0.0
  $region13: #{_focal_loss.1} parent=0 // pred_fallthru
    _
  %v60 = vld [vmem:[%s44] sm:$0xff]
  %v61 = vld [vmem:[%s44 + $0x8] sm:$0xff]
  %v62 = vld [vmem:[%s52] sm:$0xff]
  %v63 = vld [vmem:[%s52 + $0x8] sm:$0xff]
  %v64 = vand.u32 2147483647, %v60
  %v65 = vand.u32 2147483647, %v61
  %v66 = vsub.f32 0.0, %v64
  %v67 = vsub.f32 0.0, %v65
  %v68 = vmul.f32 %v66, 1.442695
  %v69 = vpow.pop %v68
  %v70 = vmul.f32 %v67, 1.442695
  %v71 = vpow.pop %v70
  %v72 = vadd.f32 %v69, 1.0
  %v73 = vlog2.pop %v72
  %v74 = vmul.f32 %v73, 0.6931472
  %v75 = vmul.f32 -0.5, %v69
  %v76 = vadd.f32 %v75, 1.0
  %v77 = vmul.f32 %v76, %v69
  %v78 = vand.u32 2147483647, %v69
  %vm79 = vcmp.lt.f32.partialorder %v78, 0.0004427343
  %v80 = vsel %vm79, %v77, %v74
  %v81 = vadd.f32 %v71, 1.0
  %v82 = vlog2.pop %v81
  %v83 = vmul.f32 %v82, 0.6931472
  %v84 = vmul.f32 -0.5, %v71
  %v85 = vadd.f32 %v84, 1.0
  %v86 = vmul.f32 %v85, %v71
  %v87 = vand.u32 2147483647, %v71
  %vm88 = vcmp.lt.f32.partialorder %v87, 0.0004427343
  %v89 = vsel %vm88, %v86, %v83
  %v90 = vmul.f32 %v60, %v62
  %v91 = vmul.f32 %v61, %v63
  %v92 = vsub.f32 %v60, %v90
  %v93 = vsub.f32 %v61, %v91
  %v94 = vsub.f32 0.0, %v60
  %v95 = vsub.f32 0.0, %v61
  %v96 = vmax.f32 %v94, 0.0
  %v97 = vmax.f32 %v95, 0.0
  %v98 = vadd.f32 %v92, %v96
  %v99 = vadd.f32 %v93, %v97
  %v100 = vadd.f32 %v98, %v80
  %v101 = vadd.f32 %v99, %v89
  %v102 = vmul.f32 %v62, 2.0
  %v103 = vmul.f32 %v63, 2.0
  %v104 = vsub.f32 1.0, %v102
  %v105 = vsub.f32 1.0, %v103
  %v106 = vmul.f32 %v60, %v104
  %v107 = vmul.f32 %v61, %v105
  %vm108 = vcmp.ge.f32.partialorder %v106, 0.0
  %vm109 = vcmp.ge.f32.partialorder %v107, 0.0
  %v110 = vsel %vm108, 1.0, %v69
  %v111 = vsel %vm109, 1.0, %v71
  %v112 = vadd.f32 %v69, 1.0
  %v113 = vadd.f32 %v71, 1.0
  %v114 = vrcp.pop %v112
  %v115 = vmul.f32 %v110, %v114
  %v116 = vrcp.pop %v113
  %v117 = vmul.f32 %v111, %v116
  %v118 = vmul.f32 %v115, %v115
  %v119 = vmul.f32 %v117, %v117
  %v120 = vmul.f32 %v118, %v100
  %v121 = vmul.f32 %v119, %v101
  %v122 = vld [vmem:[%s2] sm:$0xff]
  %v123 = vadd.f32 %v120, %v121
  %v124 = vadd.f32 %v122, %v123
  %125 = vst [vmem:[%s2] sm:$0xff] %v124
  // Predicated region
  $region14: #{_focal_loss.1} parent=0 // pred_check
    _
  $region15: #{_focal_loss.1} parent=0 // pred_check_branch
    %127 = sbr.rel (0) target = $region17
  $region16: #{_focal_loss.1} parent=0 // pred_region
    _
  $region17: #{_focal_loss.1} parent=0 // pred_fallthru
    _
  // Predicated region
  $region18: #{_focal_loss.1} parent=0 // pred_check
    _
  $region19: #{_focal_loss.1} parent=0 // pred_check_branch
    %129 = sbr.rel (0) target = $region21
  $region20: #{_focal_loss.1} parent=0 // pred_region
    _
  $region21: #{_focal_loss.1} parent=0 // pred_fallthru
    _

</llo_original>
